<compile_context>
chip_gen: v5e
topology: v5e:2x2
jax: 0.10.0
libtpu: 0.0.40
codegen_flags: <defaults>
</compile_context>

<pallas_src>
import jax
import jax.numpy as jnp
from jax.experimental import pallas as pl
from jax.experimental.pallas import tpu as pltpu

_LANE = 128          # TPU lane width (last-dim tile)
_MAX_BATCH_TILE = 512  # batch tile when B is large (multiple of 8, VMEM-friendly)


def _qactor_kernel(state_ref, aparam_ref, ws_ref, wp_ref, b_ref, q_ref):
    # Two accumulated MXU matmuls replace concat-then-matmul; bias folded into
    # the same f32 accumulator in the epilogue.
    q = jnp.dot(state_ref[...], ws_ref[...], preferred_element_type=jnp.float32)
    q = q + jnp.dot(aparam_ref[...], wp_ref[...],
                    preferred_element_type=jnp.float32)
    q_ref[...] = (q + b_ref[...]).astype(q_ref.dtype)


def prepare_qactor_params(weight, bias, state_size):
    """One-time (parameter-load time) reshaping of the PyTorch nn.Linear params.

    weight: (A, S+P) PyTorch layout, bias: (A,).
    Returns W_s (S, A_pad), W_p (P, A_pad), b (1, A_pad) with A_pad a multiple
    of 128 (zero-padded columns), so the kernel's output stores are lane-dense.
    """
    A, in_size = weight.shape
    assert state_size < in_size
    a_pad = pl.cdiv(A, _LANE) * _LANE
    pad = a_pad - A
    w_s = jnp.pad(weight[:, :state_size].T, ((0, 0), (0, pad)))   # (S, A_pad)
    w_p = jnp.pad(weight[:, state_size:].T, ((0, 0), (0, pad)))   # (P, A_pad)
    b = jnp.pad(bias, (0, pad)).reshape(1, a_pad)                 # (1, A_pad)
    return w_s, w_p, b


def qactor_forward(state, action_parameters, w_s, w_p, b, action_size):
    """state: (B, S), action_parameters: (B, P), prepared params from
    prepare_qactor_params. Returns Q: (B, action_size) float32."""
    B, S = state.shape
    _, P = action_parameters.shape
    a_pad = w_s.shape[1]

    # Batch tiling: full batch in one block when small, otherwise tiles of
    # _MAX_BATCH_TILE rows (multiple of 8; Pallas masks the ragged last tile).
    tb = B if B <= _MAX_BATCH_TILE else _MAX_BATCH_TILE
    grid = (pl.cdiv(B, tb),)

    q_pad = pl.pallas_call(
        _qactor_kernel,
        out_shape=jax.ShapeDtypeStruct((B, a_pad), jnp.float32),
        grid=grid,
        in_specs=[
            pl.BlockSpec((tb, S), lambda i: (i, 0)),        # state tile
            pl.BlockSpec((tb, P), lambda i: (i, 0)),        # aparams tile
            pl.BlockSpec((S, a_pad), lambda i: (0, 0)),     # W_s (resident)
            pl.BlockSpec((P, a_pad), lambda i: (0, 0)),     # W_p (resident)
            pl.BlockSpec((1, a_pad), lambda i: (0, 0)),     # bias (resident)
        ],
        out_specs=pl.BlockSpec((tb, a_pad), lambda i: (i, 0)),
        compiler_params=pltpu.CompilerParams(
            dimension_semantics=("parallel",)),              # megacore on v7x
    )(state, action_parameters, w_s, w_p, b)

    if a_pad == action_size:
        return q_pad
    return q_pad[:, :action_size]


if __name__ == "__main__":
    # Small shapes consistent with the module's forward.
    batch = 4
    state_size1 = 16
    action_parameter_size = 16
    action_size = 8
    in_size = state_size1 + action_parameter_size

    key = jax.random.PRNGKey(0)
    k_s, k_a, k_w, k_b = jax.random.split(key, 4)

    state = jax.random.normal(k_s, (batch, state_size1), dtype=jnp.float32)
    action_parameters = jax.random.normal(
        k_a, (batch, action_parameter_size), dtype=jnp.float32)

    # Deterministic nn.Linear-style init: U(-1/sqrt(in), 1/sqrt(in)).
    bound = 1.0 / jnp.sqrt(jnp.float32(in_size))
    weight = jax.random.uniform(
        k_w, (action_size, in_size), dtype=jnp.float32,
        minval=-bound, maxval=bound)
    bias = jax.random.uniform(
        k_b, (action_size,), dtype=jnp.float32, minval=-bound, maxval=bound)

    # One-time parameter preparation (split / transpose / lane-pad).
    w_s, w_p, b2 = prepare_qactor_params(weight, bias, state_size1)

    q = qactor_forward(state, action_parameters, w_s, w_p, b2, action_size)
    jax.block_until_ready(q)

    # Reference check (plain JAX, same math as the PyTorch module).
    x = jnp.concatenate([state, action_parameters], axis=1)
    q_ref = x @ weight.T + bias
    assert q.shape == (batch, action_size)
    assert jnp.allclose(q, q_ref, atol=1e-5, rtol=1e-5)

    print("KERNEL_OK")
</pallas_src>

<mosaic_0001>
module attributes {stable_mosaic.version = 11 : i64} {
  func.func @_qactor_kernel(%arg0: i32, %arg1: memref<4x16xf32, #tpu.memory_space<vmem>>, %arg2: memref<4x16xf32, #tpu.memory_space<vmem>>, %arg3: memref<16x128xf32, #tpu.memory_space<vmem>>, %arg4: memref<16x128xf32, #tpu.memory_space<vmem>>, %arg5: memref<1x128xf32, #tpu.memory_space<vmem>>, %arg6: memref<4x128xf32, #tpu.memory_space<vmem>>) attributes {dimension_semantics = [#tpu.dimension_semantics<parallel>], iteration_bounds = array<i64: 1>, scalar_prefetch = 0 : i64, scratch_operands = 0 : i64, tpu.core_type = #tpu.core_type<tc>, window_params = [{transform_indices = @transform_0, window_bounds = array<i64: 4, 16>}, {transform_indices = @transform_1, window_bounds = array<i64: 4, 16>}, {pipeline_mode = #tpu.pipeline_mode<synchronous>, transform_indices = @transform_2, window_bounds = array<i64: 16, 128>}, {pipeline_mode = #tpu.pipeline_mode<synchronous>, transform_indices = @transform_3, window_bounds = array<i64: 16, 128>}, {pipeline_mode = #tpu.pipeline_mode<synchronous>, transform_indices = @transform_4, window_bounds = array<i64: 1, 128>}, {transform_indices = @transform_5, window_bounds = array<i64: 4, 128>}]} {
    %c0 = arith.constant 0 : index
    %c0_0 = arith.constant 0 : index
    %0 = vector.load %arg1[%c0, %c0_0] : memref<4x16xf32, #tpu.memory_space<vmem>>, vector<4x16xf32>
    %c0_1 = arith.constant 0 : index
    %c0_2 = arith.constant 0 : index
    %1 = vector.load %arg3[%c0_1, %c0_2] : memref<16x128xf32, #tpu.memory_space<vmem>>, vector<16x128xf32>
    %cst = arith.constant dense<0.000000e+00> : vector<4x128xf32>
    %2 = tpu.matmul %0, %1, %cst {dimension_numbers = #tpu.dot_dimension_numbers<[1], [0], [0], [1], [0, 0, 1, 1], [], []>} : vector<4x16xf32>, vector<16x128xf32>, vector<4x128xf32> -> vector<4x128xf32>
    %c0_3 = arith.constant 0 : index
    %c0_4 = arith.constant 0 : index
    %3 = vector.load %arg2[%c0_3, %c0_4] : memref<4x16xf32, #tpu.memory_space<vmem>>, vector<4x16xf32>
    %c0_5 = arith.constant 0 : index
    %c0_6 = arith.constant 0 : index
    %4 = vector.load %arg4[%c0_5, %c0_6] : memref<16x128xf32, #tpu.memory_space<vmem>>, vector<16x128xf32>
    %cst_7 = arith.constant dense<0.000000e+00> : vector<4x128xf32>
    %5 = tpu.matmul %3, %4, %cst_7 {dimension_numbers = #tpu.dot_dimension_numbers<[1], [0], [0], [1], [0, 0, 1, 1], [], []>} : vector<4x16xf32>, vector<16x128xf32>, vector<4x128xf32> -> vector<4x128xf32>
    %6 = arith.addf %2, %5 : vector<4x128xf32>
    %c0_8 = arith.constant 0 : index
    %c0_9 = arith.constant 0 : index
    %7 = vector.load %arg5[%c0_8, %c0_9] : memref<1x128xf32, #tpu.memory_space<vmem>>, vector<1x128xf32>
    %8 = vector.broadcast %7 : vector<1x128xf32> to vector<4x128xf32>
    %9 = arith.addf %6, %8 : vector<4x128xf32>
    %c0_10 = arith.constant 0 : index
    %c0_11 = arith.constant 0 : index
    %10 = vector.load %arg6[%c0_10, %c0_11] : memref<4x128xf32, #tpu.memory_space<vmem>>, vector<4x128xf32>
    tpu.vector_store %arg6[%c0_10, %c0_11], %9 {strides = array<i32>} : memref<4x128xf32, #tpu.memory_space<vmem>>, vector<4x128xf32>,
    return
  }
  func.func @transform_0(%arg0: i32) -> (i32, i32) {
    %c0_i32 = arith.constant 0 : i32
    %c0_i32_0 = arith.constant 0 : i32
    return %arg0, %c0_i32 : i32, i32
  }
  func.func @transform_1(%arg0: i32) -> (i32, i32) {
    %c0_i32 = arith.constant 0 : i32
    %c0_i32_0 = arith.constant 0 : i32
    return %arg0, %c0_i32 : i32, i32
  }
  func.func @transform_2(%arg0: i32) -> (i32, i32) {
    %c0_i32 = arith.constant 0 : i32
    %c0_i32_0 = arith.constant 0 : i32
    %c0_i32_1 = arith.constant 0 : i32
    return %c0_i32, %c0_i32_0 : i32, i32
  }
  func.func @transform_3(%arg0: i32) -> (i32, i32) {
    %c0_i32 = arith.constant 0 : i32
    %c0_i32_0 = arith.constant 0 : i32
    %c0_i32_1 = arith.constant 0 : i32
    return %c0_i32, %c0_i32_0 : i32, i32
  }
  func.func @transform_4(%arg0: i32) -> (i32, i32) {
    %c0_i32 = arith.constant 0 : i32
    %c0_i32_0 = arith.constant 0 : i32
    %c0_i32_1 = arith.constant 0 : i32
    return %c0_i32, %c0_i32_0 : i32, i32
  }
  func.func @transform_5(%arg0: i32) -> (i32, i32) {
    %c0_i32 = arith.constant 0 : i32
    %c0_i32_0 = arith.constant 0 : i32
    return %arg0, %c0_i32 : i32, i32
  }
}

</mosaic_0001>

<llo_original>
// kernel: tpu_custom_call.1
$region0: #{tpu_custom_call.1}
  #allocation0 [shape = 'u32[]', space=smem, size = 0x4, offset = 0x4, fixed_abs, tag = 'smem constant byte address 0x4 - core index']
  #allocation1 [shape = 'u32[72,128]{1,0:T(1,128)}', space=vmem, size = 0x9000, scoped, tag = 'internal scratch']
  %s0 = inlined_call_operand.hbm [shape: f32[4,16], index: 0, kind: input, shape index: {}]
  %s1 = inlined_call_operand.hbm [shape: f32[4,16], index: 1, kind: input, shape index: {}]
  %s2 = inlined_call_operand.hbm [shape: f32[16,128], index: 2, kind: input, shape index: {}]
  %s3 = inlined_call_operand.hbm [shape: f32[16,128], index: 3, kind: input, shape index: {}]
  %s4 = inlined_call_operand.vmem [shape: f32[1,128], index: 4, kind: input, shape index: {}]
  %s5 = inlined_call_operand.hbm [shape: f32[4,128], index: 5, kind: output, shape index: {}]
  %s6 = sld [smem:[#allocation0]]
  $region46: #{tpu_custom_call.1} parent=0
    _
  %s8 = ssub.s32 1, %s6
  %s9 = scalar_select 0, %s8, %s6
  $region1: #{tpu_custom_call.1} parent=0
    #allocation2 [shape = 'u8[2048]{0}', space=vmem, size = 0x800, scoped, tag = 'input window, operand 0, single buffered']
    #allocation3 [shape = 's32[1]{0}', space=sflag, size = 0x4, scoped, tag = 'scoped memory for tpu_custom_call.1']
    #allocation4 [shape = 's32[1]{0}', space=sflag, size = 0x4, scoped, tag = 'scoped memory for tpu_custom_call.1']
    #allocation5 [shape = 'u8[2048]{0}', space=vmem, size = 0x800, scoped, tag = 'input window, operand 1, single buffered']
    #allocation6 [shape = 's32[1]{0}', space=sflag, size = 0x4, scoped, tag = 'scoped memory for tpu_custom_call.1']
    #allocation7 [shape = 'u8[8192]{0}', space=vmem, size = 0x2000, scoped, tag = 'input window, operand 2, single buffered']
    #allocation8 [shape = 'u8[8192]{0}', space=vmem, size = 0x2000, scoped, tag = 'input window, operand 3, single buffered']
    #allocation9 [shape = 's32[1]{0}', space=sflag, size = 0x4, scoped, tag = 'scoped memory for tpu_custom_call.1']
    #allocation10 [shape = 'u8[2048]{0}', space=vmem, size = 0x800, scoped, tag = 'output window, operand 0, single buffered']
    %10 = vsyncpa [#allocation3], 0
    %11 = vsyncpa [#allocation6], 0
    %12 = vsyncpa [#allocation9], 0
    %13 = vsyncpa [#allocation4], 0
    // Predicated region
    $region2: #{tpu_custom_call.1} parent=1 // pred_check
      _
    $region3: #{tpu_custom_call.1} parent=1 // pred_check_branch
      %15 = sbr.rel (0) target = $region5
    $region4: #{tpu_custom_call.1} parent=1 // pred_region
      %17 = vsyncadd [#allocation3], 0
      %s19 = sshll.u32 %s0, 4
      %s20 = int_to_ptr.hbm [resolvable:$true] %s19
      %s21 = sshll.u32 [#allocation2], 4
      %s22 = int_to_ptr.vmem [resolvable:$true] %s21
      %24 = dma.hbm_to_vmem [thread:$0]  %s20, 64, %s22, [#allocation3]
    $region5: #{tpu_custom_call.1} parent=1 // pred_fallthru
      _
    // Predicated region
    $region6: #{tpu_custom_call.1} parent=1 // pred_check
      _
    $region7: #{tpu_custom_call.1} parent=1 // pred_check_branch
      %26 = sbr.rel (0) target = $region9
    $region8: #{tpu_custom_call.1} parent=1 // pred_region
      %28 = vsyncadd [#allocation6], 0
      %s30 = sshll.u32 %s1, 4
      %s31 = int_to_ptr.hbm [resolvable:$true] %s30
      %s32 = sshll.u32 [#allocation5], 4
      %s33 = int_to_ptr.vmem [resolvable:$true] %s32
      %35 = dma.hbm_to_vmem [thread:$0]  %s31, 64, %s33, [#allocation6]
    $region9: #{tpu_custom_call.1} parent=1 // pred_fallthru
      _
    // Predicated region
    $region10: #{tpu_custom_call.1} parent=1 // pred_check
      _
    $region11: #{tpu_custom_call.1} parent=1 // pred_check_branch
      %37 = sbr.rel (0) target = $region13
    $region12: #{tpu_custom_call.1} parent=1 // pred_region
      %39 = vsyncadd [#allocation6], 0
      %s40 = sshll.u32 %s2, 4
      %s41 = int_to_ptr.hbm [resolvable:$true] %s40
      %s42 = sshll.u32 [#allocation7], 4
      %s43 = int_to_ptr.vmem [resolvable:$true] %s42
      %48 = dma.hbm_to_vmem [thread:$0]  %s41, 256, %s43, [#allocation6], 128, 128, 8
    $region13: #{tpu_custom_call.1} parent=1 // pred_fallthru
      _
    // Predicated region
    $region14: #{tpu_custom_call.1} parent=1 // pred_check
      _
    $region15: #{tpu_custom_call.1} parent=1 // pred_check_branch
      %50 = sbr.rel (0) target = $region17
    $region16: #{tpu_custom_call.1} parent=1 // pred_region
      %52 = vsyncadd [#allocation9], 0
      %s53 = sshll.u32 %s3, 4
      %s54 = int_to_ptr.hbm [resolvable:$true] %s53
      %s55 = sshll.u32 [#allocation8], 4
      %s56 = int_to_ptr.vmem [resolvable:$true] %s55
      %61 = dma.hbm_to_vmem [thread:$0]  %s54, 256, %s56, [#allocation9], 128, 128, 8
    $region17: #{tpu_custom_call.1} parent=1 // pred_fallthru
      _
    // Predicated region
    $region18: #{tpu_custom_call.1} parent=1 // pred_check
      _
    $region19: #{tpu_custom_call.1} parent=1 // pred_check_branch
      %63 = sbr.rel (0) target = $region21
    $region20: #{tpu_custom_call.1} parent=1 // pred_region
      _
    $region21: #{tpu_custom_call.1} parent=1 // pred_fallthru
      _
    // Predicated region
    $region22: #{tpu_custom_call.1} parent=1 // pred_check
      _
    $region23: #{tpu_custom_call.1} parent=1 // pred_check_branch
      %65 = sbr.rel (0) target = $region25
    $region24: #{tpu_custom_call.1} parent=1 // pred_region
      %67 = dma.done [#allocation3], 64
    $region25: #{tpu_custom_call.1} parent=1 // pred_fallthru
      _
    // Predicated region
    $region26: #{tpu_custom_call.1} parent=1 // pred_check
      _
    $region27: #{tpu_custom_call.1} parent=1 // pred_check_branch
      %69 = sbr.rel (0) target = $region29
    $region28: #{tpu_custom_call.1} parent=1 // pred_region
      %71 = dma.done [#allocation6], 64
    $region29: #{tpu_custom_call.1} parent=1 // pred_fallthru
      _
    // Predicated region
    $region30: #{tpu_custom_call.1} parent=1 // pred_check
      _
    $region31: #{tpu_custom_call.1} parent=1 // pred_check_branch
      %73 = sbr.rel (0) target = $region33
    $region32: #{tpu_custom_call.1} parent=1 // pred_region
      %75 = dma.done [#allocation6], 256
    $region33: #{tpu_custom_call.1} parent=1 // pred_fallthru
      _
    // Predicated region
    $region34: #{tpu_custom_call.1} parent=1 // pred_check
      _
    $region35: #{tpu_custom_call.1} parent=1 // pred_check_branch
      %77 = sbr.rel (0) target = $region37
    $region36: #{tpu_custom_call.1} parent=1 // pred_region
      %79 = dma.done [#allocation9], 256
    $region37: #{tpu_custom_call.1} parent=1 // pred_fallthru
      _
    %v80 = vld [vmem:[#allocation2] sm:$0xf]
    %v81 = vld [vmem:[#allocation7] sm:$0xff]
    %v82 = vld [vmem:[#allocation7 + $0x8] sm:$0xff]
    %v83 = vld [vmem:[#allocation5] sm:$0xf]
    %v84 = vld [vmem:[#allocation8] sm:$0xff]
    %v85 = vld [vmem:[#allocation8 + $0x8] sm:$0xff]
    %vm86 = vcmask 130048
    %v88 = vsel %vm86, %v83, 0
    %90 = vmatpush.msra.mxu0 0.0
    %91 = vmatpush.msra.mxu0 0.0
    %92 = vmatpush.msra.mxu0 0.0
    %93 = vmatpush.msra.mxu0 0.0
    %94 = vmatpush.msra.mxu0 0.0
    %95 = vmatpush.msra.mxu0 0.0
    %96 = vmatpush.msra.mxu0 0.0
    %97 = vmatpush.msra.mxu0 0.0
    %98 = vmatpush.msra.mxu0 0.0
    %99 = vmatpush.msra.mxu0 0.0
    %100 = vmatpush.msra.mxu0 0.0
    %101 = vmatpush.msra.mxu0 0.0
    %102 = vmatpush.msra.mxu0 0.0
    %103 = vmatpush.msra.mxu0 0.0
    %104 = vmatpush.msra.mxu0 %v85
    %105 = vmatpush.msra.mxu0 %v84
    %106 = vmatmul.f32.gmra.mxu0 %v88
    %v107 = vpop.f32.mrf.mxu0
    %v108 = vadd.f32 0.0, %v107
    %109 = vdwg.mxu0
    %v111 = vsel %vm86, %v80, 0
    %113 = vmatpush.msra.mxu0 0.0
    %114 = vmatpush.msra.mxu0 0.0
    %115 = vmatpush.msra.mxu0 0.0
    %116 = vmatpush.msra.mxu0 0.0
    %117 = vmatpush.msra.mxu0 0.0
    %118 = vmatpush.msra.mxu0 0.0
    %119 = vmatpush.msra.mxu0 0.0
    %120 = vmatpush.msra.mxu0 0.0
    %121 = vmatpush.msra.mxu0 0.0
    %122 = vmatpush.msra.mxu0 0.0
    %123 = vmatpush.msra.mxu0 0.0
    %124 = vmatpush.msra.mxu0 0.0
    %125 = vmatpush.msra.mxu0 0.0
    %126 = vmatpush.msra.mxu0 0.0
    %127 = vmatpush.msra.mxu0 %v82
    %128 = vmatpush.msra.mxu0 %v81
    %129 = vmatmul.f32.gmra.mxu0 %v111
    %v130 = vpop.f32.mrf.mxu0
    %v131 = vadd.f32 %v108, %v130
    %132 = vdwg.mxu0
    %v133 = vld [vmem:[%s4] sm:$0x1]
    %v135 = vperm.slane %v133, 0
    %v137 = vadd.f32 %v131, %v135
    %138 = vst [vmem:[#allocation10] sm:$0xf] %v137
    // Predicated region
    $region38: #{tpu_custom_call.1} parent=1 // pred_check
      _
    $region39: #{tpu_custom_call.1} parent=1 // pred_check_branch
      %140 = sbr.rel (0) target = $region41
    $region40: #{tpu_custom_call.1} parent=1 // pred_region
      %142 = vsyncadd [#allocation4], 0
      %s144 = sshll.u32 [#allocation10], 4
      %s145 = int_to_ptr.vmem [resolvable:$true] %s144
      %s146 = sshll.u32 %s5, 4
      %s147 = int_to_ptr.hbm [resolvable:$true] %s146
      %149 = dma.vmem_to_hbm [thread:$0]  %s145, 64, %s147, [#allocation4]
    $region41: #{tpu_custom_call.1} parent=1 // pred_fallthru
      _
    // Predicated region
    $region42: #{tpu_custom_call.1} parent=1 // pred_check
      _
    $region43: #{tpu_custom_call.1} parent=1 // pred_check_branch
      %151 = sbr.rel (0) target = $region45
    $region44: #{tpu_custom_call.1} parent=1 // pred_region
      %153 = dma.done [#allocation4], 64
    $region45: #{tpu_custom_call.1} parent=1 // pred_fallthru
      _
    %154 = vsyncpa [#allocation3], 1
    %155 = vsyncpa [#allocation6], 1
    %156 = vsyncpa [#allocation9], 1
    %157 = vsyncpa [#allocation4], 1

</llo_original>
